<compile_context>
chip_gen: v7x
topology: tpu7x:2x2x1
jax: 0.10.0
libtpu: 0.0.40
codegen_flags: <defaults>
</compile_context>

<pallas_src>
import functools

import jax
import jax.numpy as jnp
from jax.experimental import pallas as pl
from jax.experimental.pallas import tpu as pltpu

EPS = 1e-5        # nn.BatchNorm1d default eps
FP = 128          # padded feature width (full vreg lane width)
N_WEIGHTS = 4     # input_layer, fc1, fc2, output_layer
VEC_PAGE = 4      # slab page holding bias/gamma/beta rows
N_PAGES = 5       # 4 weight pages + 1 vector page


def _customnet_kernel(x_ref, slab_ref, out_ref, *, in_dim, use_bf16):
    """Fused MLP forward, single resident block, 2 input DMAs total.

    x_ref   : [B, in_dim]          unpadded activations
    slab_ref: [5, FP, FP]          pages 0..3 weights [in,out] (zero padded),
                                   page 4 rows 0..9 = b0,g0,be0,...,bo
    out_ref : [B, FP]              sigmoid output, lane-dense
                                   (wrapper slices the valid columns)
    """

    def vec(row):                        # [1, FP] broadcast row from slab page 4
        return slab_ref[VEC_PAGE, row:row + 1, :]

    def linear(h, layer, bias_row, k=FP):      # MXU matmul + bias
        w = slab_ref[layer, :k, :]
        if use_bf16:
            acc = jnp.dot(h.astype(jnp.bfloat16), w.astype(jnp.bfloat16),
                          preferred_element_type=jnp.float32)
        else:
            acc = jnp.dot(h, w, preferred_element_type=jnp.float32)
        return acc + vec(bias_row)

    def bn_relu(h, gamma_row, beta_row):
        # Training-mode BatchNorm1d over the full batch (two-pass statistics:
        # avoids E[h^2]-mean^2 cancellation; data is VMEM-resident so cheap).
        inv_n = 1.0 / h.shape[0]
        mean = jnp.sum(h, axis=0, keepdims=True) * inv_n
        c = h - mean
        var = jnp.sum(c * c, axis=0, keepdims=True) * inv_n
        h_hat = c * jax.lax.rsqrt(var + EPS)
        return jnp.maximum(h_hat * vec(gamma_row) + vec(beta_row), 0.0)

    h = x_ref[...]
    h = bn_relu(linear(h, 0, 0, k=in_dim), 1, 2)  # input_layer + bn_input + relu
    h = bn_relu(linear(h, 1, 3), 4, 5)            # fc1 + batch_norm_1 + relu
    h = bn_relu(linear(h, 2, 6), 7, 8)            # fc2 + batch_norm_2 + relu
    out_ref[...] = jax.nn.sigmoid(linear(h, 3, 9))  # output_layer + sigmoid


def _pad_to(a, rows, cols):
    return jnp.pad(a, ((0, rows - a.shape[0]), (0, cols - a.shape[1])))


def pack_params(params):
    """Fuse the 14 small parameter arrays into ONE [5, FP, FP] slab (1 DMA).

    params: [w0,b0,g0,be0, w1,b1,g1,be1, w2,b2,g2,be2, wo,bo]
            weights stored as [in, out]; vectors as [1, F].
    """
    w0, b0, g0, be0, w1, b1, g1, be1, w2, b2, g2, be2, wo, bo = params
    for w in (w0, w1, w2, wo):
        assert w.shape[0] <= FP and w.shape[1] <= FP, "dims must be <= 128"
    w_pages = [_pad_to(w, FP, FP) for w in (w0, w1, w2, wo)]
    rows = [b0, g0, be0, b1, g1, be1, b2, g2, be2, bo]
    v_page = jnp.concatenate([_pad_to(r, 1, FP) for r in rows], axis=0)
    v_page = jnp.pad(v_page, ((0, FP - v_page.shape[0]), (0, 0)))
    return jnp.stack(w_pages + [v_page], axis=0)          # [5, FP, FP]


def _vmem_limit_bytes(batch, in_dim):
    """Scoped-VMEM budget sized to the actual buffers, with headroom."""
    slab_bytes = N_PAGES * FP * FP * 4
    x_bytes = batch * in_dim * 4
    out_bytes = batch * FP * 4
    act_bytes = 8 * batch * FP * 4            # live f32 intermediates (generous)
    budget = 2 * (slab_bytes + x_bytes + out_bytes) + act_bytes + (1 << 20)
    return int(min(max(budget, 8 << 20), 60 << 20))   # stay under v7x 64 MiB


def make_customnet_forward(params, *, use_bf16_matmul=False):
    """Pack parameters ONCE and return a jitted forward(x) closure.

    use_bf16_matmul: cast matmul inputs to bf16 (worthwhile at large batch on
    v6e/v7x; keep False on v5e and for small batches / tight tolerances).
    """
    in_dim = params[0].shape[0]
    out_dim = params[-1].shape[1]
    slab = pack_params(params)                # hoisted out of the call path

    kernel = functools.partial(_customnet_kernel, in_dim=in_dim,
                               use_bf16=use_bf16_matmul)

    @jax.jit
    def forward(x):
        B = x.shape[0]
        out_pad = pl.pallas_call(
            kernel,
            out_shape=jax.ShapeDtypeStruct((B, FP), jnp.float32),
            grid=(1,),
            in_specs=[
                # block == full array: legal for any (B, in_dim), no padding
                pl.BlockSpec((B, in_dim), lambda i: (0, 0)),
                pl.BlockSpec((N_PAGES, FP, FP), lambda i: (0, 0, 0)),
            ],
            out_specs=pl.BlockSpec((B, FP), lambda i: (0, 0)),
            compiler_params=pltpu.CompilerParams(
                dimension_semantics=("arbitrary",),
                vmem_limit_bytes=_vmem_limit_bytes(B, in_dim)),
        )(x, slab)
        return out_pad[:, :out_dim]

    return forward


def init_params(key, input_dim, hidden_layers, output_dim):
    """PyTorch-default-style init. Weights stored transposed as [in, out]."""
    params = []
    dims = [input_dim] + list(hidden_layers)
    keys = jax.random.split(key, len(hidden_layers) + 1)

    for li, (fan_in, fan_out) in enumerate(zip(dims[:-1], dims[1:])):
        kw, kb = jax.random.split(keys[li])
        bound = 1.0 / (fan_in ** 0.5)
        w = jax.random.uniform(kw, (fan_in, fan_out), jnp.float32, -bound, bound)
        b = jax.random.uniform(kb, (1, fan_out), jnp.float32, -bound, bound)
        gamma = jnp.ones((1, fan_out), jnp.float32)
        beta = jnp.zeros((1, fan_out), jnp.float32)
        params += [w, b, gamma, beta]

    fan_in = hidden_layers[-1]
    kw, kb = jax.random.split(keys[-1])
    bound = 1.0 / (fan_in ** 0.5)
    wo = jax.random.uniform(kw, (fan_in, output_dim), jnp.float32, -bound, bound)
    bo = jax.random.uniform(kb, (1, output_dim), jnp.float32, -bound, bound)
    params += [wo, bo]
    return params


def reference_forward(x, params):
    """Pure-JAX reference of the same math (two-pass BN, unpadded)."""
    (w0, b0, g0, be0, w1, b1, g1, be1, w2, b2, g2, be2, wo, bo) = params

    def bn_relu(h, g, be):
        m = jnp.mean(h, axis=0, keepdims=True)
        v = jnp.mean((h - m) ** 2, axis=0, keepdims=True)
        return jnp.maximum((h - m) / jnp.sqrt(v + EPS) * g + be, 0.0)

    h = bn_relu(x @ w0 + b0, g0, be0)
    h = bn_relu(h @ w1 + b1, g1, be1)
    h = bn_relu(h @ w2 + b2, g2, be2)
    return jax.nn.sigmoid(h @ wo + bo)


if __name__ == "__main__":
    key = jax.random.PRNGKey(0)
    k_x, k_p = jax.random.split(key)

    batch = 8
    input_dim = 16
    hidden_layers = [32, 32, 32]   # num_layers == 3 -> all branches active
    output_dim = 1

    x = jax.random.normal(k_x, (batch, input_dim), jnp.float32)
    params = init_params(k_p, input_dim, hidden_layers, output_dim)

    forward = make_customnet_forward(params)   # packing happens once, here
    out = forward(x)
    out = jax.block_until_ready(out)

    ref = reference_forward(x, params)
    assert out.shape == (batch, output_dim)
    assert jnp.allclose(out, ref, atol=1e-4, rtol=1e-4), "mismatch vs reference"

    print("KERNEL_OK")
</pallas_src>

<mosaic_0001>
module attributes {stable_mosaic.version = 11 : i64} {
  func.func @_customnet_kernel(%arg0: i32, %arg1: memref<8x16xf32, #tpu.memory_space<vmem>>, %arg2: memref<5x128x128xf32, #tpu.memory_space<vmem>>, %arg3: memref<8x128xf32, #tpu.memory_space<vmem>>) attributes {dimension_semantics = [#tpu.dimension_semantics<arbitrary>], iteration_bounds = array<i64: 1>, scalar_prefetch = 0 : i64, scratch_operands = 0 : i64, tpu.core_type = #tpu.core_type<tc>, window_params = [{pipeline_mode = #tpu.pipeline_mode<synchronous>, transform_indices = @transform_0, window_bounds = array<i64: 8, 16>}, {pipeline_mode = #tpu.pipeline_mode<synchronous>, transform_indices = @transform_1, window_bounds = array<i64: 5, 128, 128>}, {pipeline_mode = #tpu.pipeline_mode<synchronous>, transform_indices = @transform_2, window_bounds = array<i64: 8, 128>}]} {
    %c0 = arith.constant 0 : index
    %c0_0 = arith.constant 0 : index
    %0 = vector.load %arg1[%c0, %c0_0] : memref<8x16xf32, #tpu.memory_space<vmem>>, vector<8x16xf32>
    %c0_1 = arith.constant 0 : index
    %c0_2 = arith.constant 0 : index
    %c0_3 = arith.constant 0 : index
    %1 = vector.load %arg2[%c0_1, %c0_2, %c0_3] : memref<5x128x128xf32, #tpu.memory_space<vmem>>, vector<1x16x128xf32>
    %2 = vector.shape_cast %1 : vector<1x16x128xf32> to vector<16x128xf32>
    %cst = arith.constant dense<0.000000e+00> : vector<8x128xf32>
    %3 = tpu.matmul %0, %2, %cst {dimension_numbers = #tpu.dot_dimension_numbers<[1], [0], [0], [1], [0, 0, 1, 1], [], []>} : vector<8x16xf32>, vector<16x128xf32>, vector<8x128xf32> -> vector<8x128xf32>
    %c4 = arith.constant 4 : index
    %c0_4 = arith.constant 0 : index
    %c0_5 = arith.constant 0 : index
    %4 = vector.load %arg2[%c4, %c0_4, %c0_5] : memref<5x128x128xf32, #tpu.memory_space<vmem>>, vector<1x1x128xf32>
    %5 = vector.shape_cast %4 : vector<1x1x128xf32> to vector<1x128xf32>
    %6 = vector.broadcast %5 : vector<1x128xf32> to vector<8x128xf32>
    %7 = arith.addf %3, %6 : vector<8x128xf32>
    %cst_6 = arith.constant dense<0.000000e+00> : vector<128xf32>
    %8 = vector.multi_reduction <add>, %7, %cst_6 [0] : vector<8x128xf32> to vector<128xf32>
    %9 = vector.shape_cast %8 : vector<128xf32> to vector<1x128xf32>
    %cst_7 = arith.constant 1.250000e-01 : f32
    %10 = vector.broadcast %cst_7 : f32 to vector<1x128xf32>
    %11 = arith.mulf %9, %10 : vector<1x128xf32>
    %12 = vector.broadcast %11 : vector<1x128xf32> to vector<8x128xf32>
    %13 = arith.subf %7, %12 : vector<8x128xf32>
    %14 = arith.mulf %13, %13 : vector<8x128xf32>
    %cst_8 = arith.constant dense<0.000000e+00> : vector<128xf32>
    %15 = vector.multi_reduction <add>, %14, %cst_8 [0] : vector<8x128xf32> to vector<128xf32>
    %16 = vector.shape_cast %15 : vector<128xf32> to vector<1x128xf32>
    %cst_9 = arith.constant 1.250000e-01 : f32
    %17 = vector.broadcast %cst_9 : f32 to vector<1x128xf32>
    %18 = arith.mulf %16, %17 : vector<1x128xf32>
    %cst_10 = arith.constant 9.99999974E-6 : f32
    %19 = vector.broadcast %cst_10 : f32 to vector<1x128xf32>
    %20 = arith.addf %18, %19 : vector<1x128xf32>
    %21 = math.rsqrt %20 : vector<1x128xf32>
    %22 = vector.broadcast %21 : vector<1x128xf32> to vector<8x128xf32>
    %23 = arith.mulf %13, %22 : vector<8x128xf32>
    %c4_11 = arith.constant 4 : index
    %c1 = arith.constant 1 : index
    %c0_12 = arith.constant 0 : index
    %24 = vector.load %arg2[%c4_11, %c1, %c0_12] : memref<5x128x128xf32, #tpu.memory_space<vmem>>, vector<1x1x128xf32>
    %25 = vector.shape_cast %24 : vector<1x1x128xf32> to vector<1x128xf32>
    %26 = vector.broadcast %25 : vector<1x128xf32> to vector<8x128xf32>
    %27 = arith.mulf %23, %26 : vector<8x128xf32>
    %c4_13 = arith.constant 4 : index
    %c2 = arith.constant 2 : index
    %c0_14 = arith.constant 0 : index
    %28 = vector.load %arg2[%c4_13, %c2, %c0_14] : memref<5x128x128xf32, #tpu.memory_space<vmem>>, vector<1x1x128xf32>
    %29 = vector.shape_cast %28 : vector<1x1x128xf32> to vector<1x128xf32>
    %30 = vector.broadcast %29 : vector<1x128xf32> to vector<8x128xf32>
    %31 = arith.addf %27, %30 : vector<8x128xf32>
    %cst_15 = arith.constant 0.000000e+00 : f32
    %32 = vector.broadcast %cst_15 : f32 to vector<8x128xf32>
    %33 = arith.maximumf %31, %32 : vector<8x128xf32>
    %c1_16 = arith.constant 1 : index
    %c0_17 = arith.constant 0 : index
    %c0_18 = arith.constant 0 : index
    %34 = vector.load %arg2[%c1_16, %c0_17, %c0_18] : memref<5x128x128xf32, #tpu.memory_space<vmem>>, vector<1x128x128xf32>
    %35 = vector.shape_cast %34 : vector<1x128x128xf32> to vector<128x128xf32>
    %cst_19 = arith.constant dense<0.000000e+00> : vector<8x128xf32>
    %36 = tpu.matmul %33, %35, %cst_19 {dimension_numbers = #tpu.dot_dimension_numbers<[1], [0], [0], [1], [0, 0, 1, 1], [], []>} : vector<8x128xf32>, vector<128x128xf32>, vector<8x128xf32> -> vector<8x128xf32>
    %c4_20 = arith.constant 4 : index
    %c3 = arith.constant 3 : index
    %c0_21 = arith.constant 0 : index
    %37 = vector.load %arg2[%c4_20, %c3, %c0_21] : memref<5x128x128xf32, #tpu.memory_space<vmem>>, vector<1x1x128xf32>
    %38 = vector.shape_cast %37 : vector<1x1x128xf32> to vector<1x128xf32>
    %39 = vector.broadcast %38 : vector<1x128xf32> to vector<8x128xf32>
    %40 = arith.addf %36, %39 : vector<8x128xf32>
    %cst_22 = arith.constant dense<0.000000e+00> : vector<128xf32>
    %41 = vector.multi_reduction <add>, %40, %cst_22 [0] : vector<8x128xf32> to vector<128xf32>
    %42 = vector.shape_cast %41 : vector<128xf32> to vector<1x128xf32>
    %cst_23 = arith.constant 1.250000e-01 : f32
    %43 = vector.broadcast %cst_23 : f32 to vector<1x128xf32>
    %44 = arith.mulf %42, %43 : vector<1x128xf32>
    %45 = vector.broadcast %44 : vector<1x128xf32> to vector<8x128xf32>
    %46 = arith.subf %40, %45 : vector<8x128xf32>
    %47 = arith.mulf %46, %46 : vector<8x128xf32>
    %cst_24 = arith.constant dense<0.000000e+00> : vector<128xf32>
    %48 = vector.multi_reduction <add>, %47, %cst_24 [0] : vector<8x128xf32> to vector<128xf32>
    %49 = vector.shape_cast %48 : vector<128xf32> to vector<1x128xf32>
    %cst_25 = arith.constant 1.250000e-01 : f32
    %50 = vector.broadcast %cst_25 : f32 to vector<1x128xf32>
    %51 = arith.mulf %49, %50 : vector<1x128xf32>
    %cst_26 = arith.constant 9.99999974E-6 : f32
    %52 = vector.broadcast %cst_26 : f32 to vector<1x128xf32>
    %53 = arith.addf %51, %52 : vector<1x128xf32>
    %54 = math.rsqrt %53 : vector<1x128xf32>
    %55 = vector.broadcast %54 : vector<1x128xf32> to vector<8x128xf32>
    %56 = arith.mulf %46, %55 : vector<8x128xf32>
    %c4_27 = arith.constant 4 : index
    %c4_28 = arith.constant 4 : index
    %c0_29 = arith.constant 0 : index
    %57 = vector.load %arg2[%c4_27, %c4_28, %c0_29] : memref<5x128x128xf32, #tpu.memory_space<vmem>>, vector<1x1x128xf32>
    %58 = vector.shape_cast %57 : vector<1x1x128xf32> to vector<1x128xf32>
    %59 = vector.broadcast %58 : vector<1x128xf32> to vector<8x128xf32>
    %60 = arith.mulf %56, %59 : vector<8x128xf32>
    %c4_30 = arith.constant 4 : index
    %c5 = arith.constant 5 : index
    %c0_31 = arith.constant 0 : index
    %61 = vector.load %arg2[%c4_30, %c5, %c0_31] : memref<5x128x128xf32, #tpu.memory_space<vmem>>, vector<1x1x128xf32>
    %62 = vector.shape_cast %61 : vector<1x1x128xf32> to vector<1x128xf32>
    %63 = vector.broadcast %62 : vector<1x128xf32> to vector<8x128xf32>
    %64 = arith.addf %60, %63 : vector<8x128xf32>
    %cst_32 = arith.constant 0.000000e+00 : f32
    %65 = vector.broadcast %cst_32 : f32 to vector<8x128xf32>
    %66 = arith.maximumf %64, %65 : vector<8x128xf32>
    %c2_33 = arith.constant 2 : index
    %c0_34 = arith.constant 0 : index
    %c0_35 = arith.constant 0 : index
    %67 = vector.load %arg2[%c2_33, %c0_34, %c0_35] : memref<5x128x128xf32, #tpu.memory_space<vmem>>, vector<1x128x128xf32>
    %68 = vector.shape_cast %67 : vector<1x128x128xf32> to vector<128x128xf32>
    %cst_36 = arith.constant dense<0.000000e+00> : vector<8x128xf32>
    %69 = tpu.matmul %66, %68, %cst_36 {dimension_numbers = #tpu.dot_dimension_numbers<[1], [0], [0], [1], [0, 0, 1, 1], [], []>} : vector<8x128xf32>, vector<128x128xf32>, vector<8x128xf32> -> vector<8x128xf32>
    %c4_37 = arith.constant 4 : index
    %c6 = arith.constant 6 : index
    %c0_38 = arith.constant 0 : index
    %70 = vector.load %arg2[%c4_37, %c6, %c0_38] : memref<5x128x128xf32, #tpu.memory_space<vmem>>, vector<1x1x128xf32>
    %71 = vector.shape_cast %70 : vector<1x1x128xf32> to vector<1x128xf32>
    %72 = vector.broadcast %71 : vector<1x128xf32> to vector<8x128xf32>
    %73 = arith.addf %69, %72 : vector<8x128xf32>
    %cst_39 = arith.constant dense<0.000000e+00> : vector<128xf32>
    %74 = vector.multi_reduction <add>, %73, %cst_39 [0] : vector<8x128xf32> to vector<128xf32>
    %75 = vector.shape_cast %74 : vector<128xf32> to vector<1x128xf32>
    %cst_40 = arith.constant 1.250000e-01 : f32
    %76 = vector.broadcast %cst_40 : f32 to vector<1x128xf32>
    %77 = arith.mulf %75, %76 : vector<1x128xf32>
    %78 = vector.broadcast %77 : vector<1x128xf32> to vector<8x128xf32>
    %79 = arith.subf %73, %78 : vector<8x128xf32>
    %80 = arith.mulf %79, %79 : vector<8x128xf32>
    %cst_41 = arith.constant dense<0.000000e+00> : vector<128xf32>
    %81 = vector.multi_reduction <add>, %80, %cst_41 [0] : vector<8x128xf32> to vector<128xf32>
    %82 = vector.shape_cast %81 : vector<128xf32> to vector<1x128xf32>
    %cst_42 = arith.constant 1.250000e-01 : f32
    %83 = vector.broadcast %cst_42 : f32 to vector<1x128xf32>
    %84 = arith.mulf %82, %83 : vector<1x128xf32>
    %cst_43 = arith.constant 9.99999974E-6 : f32
    %85 = vector.broadcast %cst_43 : f32 to vector<1x128xf32>
    %86 = arith.addf %84, %85 : vector<1x128xf32>
    %87 = math.rsqrt %86 : vector<1x128xf32>
    %88 = vector.broadcast %87 : vector<1x128xf32> to vector<8x128xf32>
    %89 = arith.mulf %79, %88 : vector<8x128xf32>
    %c4_44 = arith.constant 4 : index
    %c7 = arith.constant 7 : index
    %c0_45 = arith.constant 0 : index
    %90 = vector.load %arg2[%c4_44, %c7, %c0_45] : memref<5x128x128xf32, #tpu.memory_space<vmem>>, vector<1x1x128xf32>
    %91 = vector.shape_cast %90 : vector<1x1x128xf32> to vector<1x128xf32>
    %92 = vector.broadcast %91 : vector<1x128xf32> to vector<8x128xf32>
    %93 = arith.mulf %89, %92 : vector<8x128xf32>
    %c4_46 = arith.constant 4 : index
    %c8 = arith.constant 8 : index
    %c0_47 = arith.constant 0 : index
    %94 = vector.load %arg2[%c4_46, %c8, %c0_47] : memref<5x128x128xf32, #tpu.memory_space<vmem>>, vector<1x1x128xf32>
    %95 = vector.shape_cast %94 : vector<1x1x128xf32> to vector<1x128xf32>
    %96 = vector.broadcast %95 : vector<1x128xf32> to vector<8x128xf32>
    %97 = arith.addf %93, %96 : vector<8x128xf32>
    %cst_48 = arith.constant 0.000000e+00 : f32
    %98 = vector.broadcast %cst_48 : f32 to vector<8x128xf32>
    %99 = arith.maximumf %97, %98 : vector<8x128xf32>
    %c3_49 = arith.constant 3 : index
    %c0_50 = arith.constant 0 : index
    %c0_51 = arith.constant 0 : index
    %100 = vector.load %arg2[%c3_49, %c0_50, %c0_51] : memref<5x128x128xf32, #tpu.memory_space<vmem>>, vector<1x128x128xf32>
    %101 = vector.shape_cast %100 : vector<1x128x128xf32> to vector<128x128xf32>
    %cst_52 = arith.constant dense<0.000000e+00> : vector<8x128xf32>
    %102 = tpu.matmul %99, %101, %cst_52 {dimension_numbers = #tpu.dot_dimension_numbers<[1], [0], [0], [1], [0, 0, 1, 1], [], []>} : vector<8x128xf32>, vector<128x128xf32>, vector<8x128xf32> -> vector<8x128xf32>
    %c4_53 = arith.constant 4 : index
    %c9 = arith.constant 9 : index
    %c0_54 = arith.constant 0 : index
    %103 = vector.load %arg2[%c4_53, %c9, %c0_54] : memref<5x128x128xf32, #tpu.memory_space<vmem>>, vector<1x1x128xf32>
    %104 = vector.shape_cast %103 : vector<1x1x128xf32> to vector<1x128xf32>
    %105 = vector.broadcast %104 : vector<1x128xf32> to vector<8x128xf32>
    %106 = arith.addf %102, %105 : vector<8x128xf32>
    %107 = arith.negf %106 : vector<8x128xf32>
    %108 = math.exp %107 : vector<8x128xf32>
    %cst_55 = arith.constant 1.000000e+00 : f32
    %109 = vector.broadcast %cst_55 : f32 to vector<8x128xf32>
    %110 = arith.addf %109, %108 : vector<8x128xf32>
    %111 = arith.divf %109, %110 : vector<8x128xf32>
    %c0_56 = arith.constant 0 : index
    %c0_57 = arith.constant 0 : index
    %112 = vector.load %arg3[%c0_56, %c0_57] : memref<8x128xf32, #tpu.memory_space<vmem>>, vector<8x128xf32>
    tpu.vector_store %arg3[%c0_56, %c0_57], %111 {strides = array<i32>} : memref<8x128xf32, #tpu.memory_space<vmem>>, vector<8x128xf32>,
    return
  }
  func.func @transform_0(%arg0: i32) -> (i32, i32) {
    %c0_i32 = arith.constant 0 : i32
    %c0_i32_0 = arith.constant 0 : i32
    %c0_i32_1 = arith.constant 0 : i32
    return %c0_i32, %c0_i32_0 : i32, i32
  }
  func.func @transform_1(%arg0: i32) -> (i32, i32, i32) {
    %c0_i32 = arith.constant 0 : i32
    %c0_i32_0 = arith.constant 0 : i32
    %c0_i32_1 = arith.constant 0 : i32
    %c0_i32_2 = arith.constant 0 : i32
    return %c0_i32, %c0_i32_0, %c0_i32_1 : i32, i32, i32
  }
  func.func @transform_2(%arg0: i32) -> (i32, i32) {
    %c0_i32 = arith.constant 0 : i32
    %c0_i32_0 = arith.constant 0 : i32
    %c0_i32_1 = arith.constant 0 : i32
    return %c0_i32, %c0_i32_0 : i32, i32
  }
}

</mosaic_0001>

<llo_original>
// kernel: forward.1
$region0: #{forward.1}
  #allocation0 [shape = 'u32[]', space=smem, size = 0x4, offset = 0x4, fixed_abs, tag = 'smem constant byte address 0x4 - core index']
  #allocation1 [shape = 'u32[144,128]{1,0:T(1,128)}', space=vmem, size = 0x12000, scoped, tag = 'internal scratch']
  %s0 = inlined_call_operand.hbm [shape: f32[8,16], index: 0, kind: input, shape index: {}]
  %s1 = inlined_call_operand.hbm [shape: f32[5,128,128], index: 1, kind: input, shape index: {}]
  %s2 = inlined_call_operand.vmem [shape: f32[8,128], index: 2, kind: output, shape index: {}]
  %s3 = sld [smem:[#allocation0]]
  $region26: #{forward.1} parent=0
    _
  %s5 = ssub.s32 1, %s3
  %s6 = scalar_select 0, %s5, %s3
  $region1: #{forward.1} parent=0
    #allocation2 [shape = 'u8[4096]{0}', space=vmem, size = 0x1000, scoped, tag = 'input window, operand 0, single buffered']
    #allocation3 [shape = 's32[1]{0}', space=sflag, size = 0x4, scoped, tag = 'scoped memory for forward.1']
    #allocation4 [shape = 'u8[327680]{0}', space=vmem, size = 0x50000, scoped, tag = 'input window, operand 1, single buffered']
    #allocation5 [shape = 's32[1]{0}', space=sflag, size = 0x4, scoped, tag = 'scoped memory for forward.1']
    %7 = vsyncpa [#allocation3], 0
    %8 = vsyncpa [#allocation5], 0
    // Predicated region
    $region2: #{forward.1} parent=1 // pred_check
      _
    $region3: #{forward.1} parent=1 // pred_check_branch
      %10 = sbr.rel (0) target = $region5
    $region4: #{forward.1} parent=1 // pred_region
      %s12 = ssub.s32 128, 128
      %13 = vsyncadd [#allocation3], %s12
      %s15 = sshll.u32 [#allocation2], 4
      %s16 = int_to_ptr.vmem [resolvable:$true] %s15
      %18 = dma.hbm_to_vmem [thread:$0]  %s0, 128, %s16, [#allocation3]
    $region5: #{forward.1} parent=1 // pred_fallthru
      _
    // Predicated region
    $region6: #{forward.1} parent=1 // pred_check
      _
    $region7: #{forward.1} parent=1 // pred_check_branch
      %20 = sbr.rel (0) target = $region9
    $region8: #{forward.1} parent=1 // pred_region
      %s22 = ssub.s32 10240, 10240
      %23 = vsyncadd [#allocation5], %s22
      %s24 = sshll.u32 [#allocation4], 4
      %s25 = int_to_ptr.vmem [resolvable:$true] %s24
      %30 = dma.hbm_to_vmem [thread:$0]  %s1, 10240, %s25, [#allocation5], 128, 128, 8
    $region9: #{forward.1} parent=1 // pred_fallthru
      _
    // Predicated region
    $region10: #{forward.1} parent=1 // pred_check
      _
    $region11: #{forward.1} parent=1 // pred_check_branch
      %32 = sbr.rel (0) target = $region13
    $region12: #{forward.1} parent=1 // pred_region
      %33 = dma.done [#allocation3], 128
    $region13: #{forward.1} parent=1 // pred_fallthru
      _
    // Predicated region
    $region14: #{forward.1} parent=1 // pred_check
      _
    $region15: #{forward.1} parent=1 // pred_check_branch
      %35 = sbr.rel (0) target = $region17
    $region16: #{forward.1} parent=1 // pred_region
      %36 = dma.done [#allocation5], 10240
    $region17: #{forward.1} parent=1 // pred_fallthru
      _
    %v37 = vld [vmem:[#allocation2] sm:$0xff]
    %v38 = vld [vmem:[#allocation4] sm:$0xff]
    %v39 = vld [vmem:[#allocation4 + $0x8] sm:$0xff]
    %s40 = scalar_lea.vmem [#allocation4], 512
    %v41 = vld [vmem:[%s40] sm:$0x1]
    %v42 = vlaneseq
    %v43 = vshrl.u32 %v42, 7
    %v44 = vsub.s32 0, %v43
    %v45 = vrot.slane %v41, %v44
    %vm46 = vcmask 130048
    %v48 = vsel %vm46, %v37, 0
    %50 = vmatprep.subr.mxu0 0.0
    %51 = vmatpush1.msra.mxu0 %v38
    %52 = vmatprep.subr.mxu0 0.0
    %53 = vmatpush1.msra.mxu0 %v39
    %54 = vmatprep.subr.mxu0 0.0
    %55 = vmatpush1.msra.mxu0 0.0
    %56 = vmatprep.subr.mxu0 0.0
    %57 = vmatpush1.msra.mxu0 0.0
    %58 = vmatprep.subr.mxu0 0.0
    %59 = vmatpush1.msra.mxu0 0.0
    %60 = vmatprep.subr.mxu0 0.0
    %61 = vmatpush1.msra.mxu0 0.0
    %62 = vmatprep.subr.mxu0 0.0
    %63 = vmatpush1.msra.mxu0 0.0
    %64 = vmatprep.subr.mxu0 0.0
    %65 = vmatpush1.msra.mxu0 0.0
    %66 = vmatprep.subr.mxu0 0.0
    %67 = vmatpush1.msra.mxu0 0.0
    %68 = vmatprep.subr.mxu0 0.0
    %69 = vmatpush1.msra.mxu0 0.0
    %70 = vmatprep.subr.mxu0 0.0
    %71 = vmatpush1.msra.mxu0 0.0
    %72 = vmatprep.subr.mxu0 0.0
    %73 = vmatpush1.msra.mxu0 0.0
    %74 = vmatprep.subr.mxu0 0.0
    %75 = vmatpush1.msra.mxu0 0.0
    %76 = vmatprep.subr.mxu0 0.0
    %77 = vmatpush1.msra.mxu0 0.0
    %78 = vmatprep.subr.mxu0 0.0
    %79 = vmatpush1.msra.mxu0 0.0
    %80 = vmatprep.subr.mxu0 0.0
    %81 = vmatpush1.msra.mxu0 0.0
    %82 = vmatprep.subr.mxu0 0.0
    %83 = vmatpush1.msra.mxu0 0.0
    %84 = vmatprep.subr.mxu0 0.0
    %85 = vmatpush1.msra.mxu0 0.0
    %86 = vmatprep.subr.mxu0 0.0
    %87 = vmatpush1.msra.mxu0 0.0
    %88 = vmatprep.subr.mxu0 0.0
    %89 = vmatpush1.msra.mxu0 0.0
    %90 = vmatprep.subr.mxu0 0.0
    %91 = vmatpush1.msra.mxu0 0.0
    %92 = vmatprep.subr.mxu0 0.0
    %93 = vmatpush1.msra.mxu0 0.0
    %94 = vmatprep.subr.mxu0 0.0
    %95 = vmatpush1.msra.mxu0 0.0
    %96 = vmatprep.subr.mxu0 0.0
    %97 = vmatpush1.msra.mxu0 0.0
    %98 = vmatprep.subr.mxu0 0.0
    %99 = vmatpush1.msra.mxu0 0.0
    %100 = vmatprep.subr.mxu0 0.0
    %101 = vmatpush1.msra.mxu0 0.0
    %102 = vmatprep.subr.mxu0 0.0
    %103 = vmatpush1.msra.mxu0 0.0
    %104 = vmatprep.subr.mxu0 0.0
    %105 = vmatpush1.msra.mxu0 0.0
    %106 = vmatprep.subr.mxu0 0.0
    %107 = vmatpush1.msra.mxu0 0.0
    %108 = vmatprep.subr.mxu0 0.0
    %109 = vmatpush1.msra.mxu0 0.0
    %110 = vmatprep.subr.mxu0 0.0
    %111 = vmatpush1.msra.mxu0 0.0
    %112 = vmatprep.subr.mxu0 0.0
    %113 = vmatpush1.msra.mxu0 0.0
    %114 = vmatprep.mubr.f32.mxu0 0.0
    %115 = vmatmul.mubr.f32.gmra.mrb[0].mxu0 %v48
    %v116 = vpop.f32.mrb[0].mxu0
    %v117 = vadd.f32 %v45, %v116
    %v118 = vpop.f32.mrb[0].mxu0
    %119 = vdwg.mxu0
    %v120 = vrot.slane %v117, 4
    %v121 = vadd.f32 %v117, %v120
    %v122 = vrot.slane %v121, 2
    %v123 = vadd.f32 %v121, %v122
    %v124 = vrot.slane %v123, 1
    %v125 = vadd.f32 %v123, %v124
    %v126 = vmul.f32 %v125, 0.125
    %v127 = vsub.f32 %v117, %v126
    %v128 = vmul.f32 %v127, %v127
    %v129 = vrot.slane %v128, 4
    %v130 = vadd.f32 %v128, %v129
    %v131 = vrot.slane %v130, 2
    %v132 = vadd.f32 %v130, %v131
    %v133 = vrot.slane %v132, 1
    %v134 = vadd.f32 %v132, %v133
    %v135 = vmul.f32 %v134, 0.125
    %v136 = vadd.f32 %v135, 1e-05
    %v137 = vrsqrt.pop %v136
    %v138 = vmul.f32 %v127, %v137
    %v139 = vld [vmem:[%s40 + $0x1] sm:$0x1]
    %v140 = vlaneseq
    %v141 = vshrl.u32 %v140, 7
    %v142 = vsub.s32 0, %v141
    %v143 = vrot.slane %v139, %v142
    %v144 = vmul.f32 %v138, %v143
    %v145 = vld [vmem:[%s40 + $0x2] sm:$0x1]
    %v146 = vlaneseq
    %v147 = vshrl.u32 %v146, 7
    %v148 = vsub.s32 0, %v147
    %v149 = vrot.slane %v145, %v148
    %v150 = vadd.f32 %v144, %v149
    %v151 = vmax.f32 %v150, 0.0
    %s152 = scalar_lea.vmem [#allocation4], 128
    %v153 = vld [vmem:[%s152] sm:$0xff]
    %v154 = vld [vmem:[%s152 + $0x8] sm:$0xff]
    %v155 = vld [vmem:[%s152 + $0x10] sm:$0xff]
    %v156 = vld [vmem:[%s152 + $0x18] sm:$0xff]
    %v157 = vld [vmem:[%s152 + $0x20] sm:$0xff]
    %v158 = vld [vmem:[%s152 + $0x28] sm:$0xff]
    %v159 = vld [vmem:[%s152 + $0x30] sm:$0xff]
    %v160 = vld [vmem:[%s152 + $0x38] sm:$0xff]
    %v161 = vld [vmem:[%s152 + $0x40] sm:$0xff]
    %v162 = vld [vmem:[%s152 + $0x48] sm:$0xff]
    %v163 = vld [vmem:[%s152 + $0x50] sm:$0xff]
    %v164 = vld [vmem:[%s152 + $0x58] sm:$0xff]
    %v165 = vld [vmem:[%s152 + $0x60] sm:$0xff]
    %v166 = vld [vmem:[%s152 + $0x68] sm:$0xff]
    %v167 = vld [vmem:[%s152 + $0x70] sm:$0xff]
    %v168 = vld [vmem:[%s152 + $0x78] sm:$0xff]
    %v169 = vld [vmem:[%s40 + $0x3] sm:$0x1]
    %v170 = vlaneseq
    %v171 = vshrl.u32 %v170, 7
    %v172 = vsub.s32 0, %v171
    %v173 = vrot.slane %v169, %v172
    %174 = vmatprep.subr.mxu0 0.0
    %175 = vmatpush1.msra.mxu0 %v153
    %176 = vmatprep.subr.mxu0 0.0
    %177 = vmatpush1.msra.mxu0 %v154
    %178 = vmatprep.subr.mxu0 0.0
    %179 = vmatpush1.msra.mxu0 %v155
    %180 = vmatprep.subr.mxu0 0.0
    %181 = vmatpush1.msra.mxu0 %v156
    %182 = vmatprep.subr.mxu0 0.0
    %183 = vmatpush1.msra.mxu0 %v157
    %184 = vmatprep.subr.mxu0 0.0
    %185 = vmatpush1.msra.mxu0 %v158
    %186 = vmatprep.subr.mxu0 0.0
    %187 = vmatpush1.msra.mxu0 %v159
    %188 = vmatprep.subr.mxu0 0.0
    %189 = vmatpush1.msra.mxu0 %v160
    %190 = vmatprep.subr.mxu0 0.0
    %191 = vmatpush1.msra.mxu0 %v161
    %192 = vmatprep.subr.mxu0 0.0
    %193 = vmatpush1.msra.mxu0 %v162
    %194 = vmatprep.subr.mxu0 0.0
    %195 = vmatpush1.msra.mxu0 %v163
    %196 = vmatprep.subr.mxu0 0.0
    %197 = vmatpush1.msra.mxu0 %v164
    %198 = vmatprep.subr.mxu0 0.0
    %199 = vmatpush1.msra.mxu0 %v165
    %200 = vmatprep.subr.mxu0 0.0
    %201 = vmatpush1.msra.mxu0 %v166
    %202 = vmatprep.subr.mxu0 0.0
    %203 = vmatpush1.msra.mxu0 %v167
    %204 = vmatprep.subr.mxu0 0.0
    %205 = vmatpush1.msra.mxu0 %v168
    %206 = vmatprep.subr.mxu0 0.0
    %207 = vmatpush1.msra.mxu0 0.0
    %208 = vmatprep.subr.mxu0 0.0
    %209 = vmatpush1.msra.mxu0 0.0
    %210 = vmatprep.subr.mxu0 0.0
    %211 = vmatpush1.msra.mxu0 0.0
    %212 = vmatprep.subr.mxu0 0.0
    %213 = vmatpush1.msra.mxu0 0.0
    %214 = vmatprep.subr.mxu0 0.0
    %215 = vmatpush1.msra.mxu0 0.0
    %216 = vmatprep.subr.mxu0 0.0
    %217 = vmatpush1.msra.mxu0 0.0
    %218 = vmatprep.subr.mxu0 0.0
    %219 = vmatpush1.msra.mxu0 0.0
    %220 = vmatprep.subr.mxu0 0.0
    %221 = vmatpush1.msra.mxu0 0.0
    %222 = vmatprep.subr.mxu0 0.0
    %223 = vmatpush1.msra.mxu0 0.0
    %224 = vmatprep.subr.mxu0 0.0
    %225 = vmatpush1.msra.mxu0 0.0
    %226 = vmatprep.subr.mxu0 0.0
    %227 = vmatpush1.msra.mxu0 0.0
    %228 = vmatprep.subr.mxu0 0.0
    %229 = vmatpush1.msra.mxu0 0.0
    %230 = vmatprep.subr.mxu0 0.0
    %231 = vmatpush1.msra.mxu0 0.0
    %232 = vmatprep.subr.mxu0 0.0
    %233 = vmatpush1.msra.mxu0 0.0
    %234 = vmatprep.subr.mxu0 0.0
    %235 = vmatpush1.msra.mxu0 0.0
    %236 = vmatprep.subr.mxu0 0.0
    %237 = vmatpush1.msra.mxu0 0.0
    %238 = vmatprep.mubr.f32.mxu0 0.0
    %239 = vmatmul.mubr.f32.gmra.mrb[0].mxu0 %v151
    %v240 = vpop.f32.mrb[0].mxu0
    %v241 = vadd.f32 %v173, %v240
    %v242 = vpop.f32.mrb[0].mxu0
    %243 = vdwg.mxu0
    %v244 = vrot.slane %v241, 4
    %v245 = vadd.f32 %v241, %v244
    %v246 = vrot.slane %v245, 2
    %v247 = vadd.f32 %v245, %v246
    %v248 = vrot.slane %v247, 1
    %v249 = vadd.f32 %v247, %v248
    %v250 = vmul.f32 %v249, 0.125
    %v251 = vsub.f32 %v241, %v250
    %v252 = vmul.f32 %v251, %v251
    %v253 = vrot.slane %v252, 4
    %v254 = vadd.f32 %v252, %v253
    %v255 = vrot.slane %v254, 2
    %v256 = vadd.f32 %v254, %v255
    %v257 = vrot.slane %v256, 1
    %v258 = vadd.f32 %v256, %v257
    %v259 = vmul.f32 %v258, 0.125
    %v260 = vadd.f32 %v259, 1e-05
    %v261 = vrsqrt.pop %v260
    %v262 = vmul.f32 %v251, %v261
    %v263 = vld [vmem:[%s40 + $0x4] sm:$0x1]
    %v264 = vlaneseq
    %v265 = vshrl.u32 %v264, 7
    %v266 = vsub.s32 0, %v265
    %v267 = vrot.slane %v263, %v266
    %v268 = vmul.f32 %v262, %v267
    %v269 = vld [vmem:[%s40 + $0x5] sm:$0x1]
    %v270 = vlaneseq
    %v271 = vshrl.u32 %v270, 7
    %v272 = vsub.s32 0, %v271
    %v273 = vrot.slane %v269, %v272
    %v274 = vadd.f32 %v268, %v273
    %v275 = vmax.f32 %v274, 0.0
    %s276 = scalar_lea.vmem [#allocation4], 256
    %v277 = vld [vmem:[%s276] sm:$0xff]
    %v278 = vld [vmem:[%s276 + $0x8] sm:$0xff]
    %v279 = vld [vmem:[%s276 + $0x10] sm:$0xff]
    %v280 = vld [vmem:[%s276 + $0x18] sm:$0xff]
    %v281 = vld [vmem:[%s276 + $0x20] sm:$0xff]
    %v282 = vld [vmem:[%s276 + $0x28] sm:$0xff]
    %v283 = vld [vmem:[%s276 + $0x30] sm:$0xff]
    %v284 = vld [vmem:[%s276 + $0x38] sm:$0xff]
    %v285 = vld [vmem:[%s276 + $0x40] sm:$0xff]
    %v286 = vld [vmem:[%s276 + $0x48] sm:$0xff]
    %v287 = vld [vmem:[%s276 + $0x50] sm:$0xff]
    %v288 = vld [vmem:[%s276 + $0x58] sm:$0xff]
    %v289 = vld [vmem:[%s276 + $0x60] sm:$0xff]
    %v290 = vld [vmem:[%s276 + $0x68] sm:$0xff]
    %v291 = vld [vmem:[%s276 + $0x70] sm:$0xff]
    %v292 = vld [vmem:[%s276 + $0x78] sm:$0xff]
    %v293 = vld [vmem:[%s40 + $0x6] sm:$0x1]
    %v294 = vlaneseq
    %v295 = vshrl.u32 %v294, 7
    %v296 = vsub.s32 0, %v295
    %v297 = vrot.slane %v293, %v296
    %298 = vmatprep.subr.mxu0 0.0
    %299 = vmatpush1.msra.mxu0 %v277
    %300 = vmatprep.subr.mxu0 0.0
    %301 = vmatpush1.msra.mxu0 %v278
    %302 = vmatprep.subr.mxu0 0.0
    %303 = vmatpush1.msra.mxu0 %v279
    %304 = vmatprep.subr.mxu0 0.0
    %305 = vmatpush1.msra.mxu0 %v280
    %306 = vmatprep.subr.mxu0 0.0
    %307 = vmatpush1.msra.mxu0 %v281
    %308 = vmatprep.subr.mxu0 0.0
    %309 = vmatpush1.msra.mxu0 %v282
    %310 = vmatprep.subr.mxu0 0.0
    %311 = vmatpush1.msra.mxu0 %v283
    %312 = vmatprep.subr.mxu0 0.0
    %313 = vmatpush1.msra.mxu0 %v284
    %314 = vmatprep.subr.mxu0 0.0
    %315 = vmatpush1.msra.mxu0 %v285
    %316 = vmatprep.subr.mxu0 0.0
    %317 = vmatpush1.msra.mxu0 %v286
    %318 = vmatprep.subr.mxu0 0.0
    %319 = vmatpush1.msra.mxu0 %v287
    %320 = vmatprep.subr.mxu0 0.0
    %321 = vmatpush1.msra.mxu0 %v288
    %322 = vmatprep.subr.mxu0 0.0
    %323 = vmatpush1.msra.mxu0 %v289
    %324 = vmatprep.subr.mxu0 0.0
    %325 = vmatpush1.msra.mxu0 %v290
    %326 = vmatprep.subr.mxu0 0.0
    %327 = vmatpush1.msra.mxu0 %v291
    %328 = vmatprep.subr.mxu0 0.0
    %329 = vmatpush1.msra.mxu0 %v292
    %330 = vmatprep.subr.mxu0 0.0
    %331 = vmatpush1.msra.mxu0 0.0
    %332 = vmatprep.subr.mxu0 0.0
    %333 = vmatpush1.msra.mxu0 0.0
    %334 = vmatprep.subr.mxu0 0.0
    %335 = vmatpush1.msra.mxu0 0.0
    %336 = vmatprep.subr.mxu0 0.0
    %337 = vmatpush1.msra.mxu0 0.0
    %338 = vmatprep.subr.mxu0 0.0
    %339 = vmatpush1.msra.mxu0 0.0
    %340 = vmatprep.subr.mxu0 0.0
    %341 = vmatpush1.msra.mxu0 0.0
    %342 = vmatprep.subr.mxu0 0.0
    %343 = vmatpush1.msra.mxu0 0.0
    %344 = vmatprep.subr.mxu0 0.0
    %345 = vmatpush1.msra.mxu0 0.0
    %346 = vmatprep.subr.mxu0 0.0
    %347 = vmatpush1.msra.mxu0 0.0
    %348 = vmatprep.subr.mxu0 0.0
    %349 = vmatpush1.msra.mxu0 0.0
    %350 = vmatprep.subr.mxu0 0.0
    %351 = vmatpush1.msra.mxu0 0.0
    %352 = vmatprep.subr.mxu0 0.0
    %353 = vmatpush1.msra.mxu0 0.0
    %354 = vmatprep.subr.mxu0 0.0
    %355 = vmatpush1.msra.mxu0 0.0
    %356 = vmatprep.subr.mxu0 0.0
    %357 = vmatpush1.msra.mxu0 0.0
    %358 = vmatprep.subr.mxu0 0.0
    %359 = vmatpush1.msra.mxu0 0.0
    %360 = vmatprep.subr.mxu0 0.0
    %361 = vmatpush1.msra.mxu0 0.0
    %362 = vmatprep.mubr.f32.mxu0 0.0
    %363 = vmatmul.mubr.f32.gmra.mrb[0].mxu0 %v275
    %v364 = vpop.f32.mrb[0].mxu0
    %v365 = vadd.f32 %v297, %v364
    %v366 = vpop.f32.mrb[0].mxu0
    %367 = vdwg.mxu0
    %v368 = vrot.slane %v365, 4
    %v369 = vadd.f32 %v365, %v368
    %v370 = vrot.slane %v369, 2
    %v371 = vadd.f32 %v369, %v370
    %v372 = vrot.slane %v371, 1
    %v373 = vadd.f32 %v371, %v372
    %v374 = vmul.f32 %v373, 0.125
    %v375 = vsub.f32 %v365, %v374
    %v376 = vmul.f32 %v375, %v375
    %v377 = vrot.slane %v376, 4
    %v378 = vadd.f32 %v376, %v377
    %v379 = vrot.slane %v378, 2
    %v380 = vadd.f32 %v378, %v379
    %v381 = vrot.slane %v380, 1
    %v382 = vadd.f32 %v380, %v381
    %v383 = vmul.f32 %v382, 0.125
    %v384 = vadd.f32 %v383, 1e-05
    %v385 = vrsqrt.pop %v384
    %v386 = vmul.f32 %v375, %v385
    %v387 = vld [vmem:[%s40 + $0x7] sm:$0x1]
    %v388 = vlaneseq
    %v389 = vshrl.u32 %v388, 7
    %v390 = vsub.s32 0, %v389
    %v391 = vrot.slane %v387, %v390
    %v392 = vmul.f32 %v386, %v391
    %v393 = vld [vmem:[%s40 + $0x8] sm:$0x1]
    %v394 = vlaneseq
    %v395 = vshrl.u32 %v394, 7
    %v396 = vsub.s32 0, %v395
    %v397 = vrot.slane %v393, %v396
    %v398 = vadd.f32 %v392, %v397
    %v399 = vmax.f32 %v398, 0.0
    %s400 = scalar_lea.vmem [#allocation4], 384
    %v401 = vld [vmem:[%s400] sm:$0xff]
    %v402 = vld [vmem:[%s400 + $0x8] sm:$0xff]
    %v403 = vld [vmem:[%s400 + $0x10] sm:$0xff]
    %v404 = vld [vmem:[%s400 + $0x18] sm:$0xff]
    %v405 = vld [vmem:[%s400 + $0x20] sm:$0xff]
    %v406 = vld [vmem:[%s400 + $0x28] sm:$0xff]
    %v407 = vld [vmem:[%s400 + $0x30] sm:$0xff]
    %v408 = vld [vmem:[%s400 + $0x38] sm:$0xff]
    %v409 = vld [vmem:[%s400 + $0x40] sm:$0xff]
    %v410 = vld [vmem:[%s400 + $0x48] sm:$0xff]
    %v411 = vld [vmem:[%s400 + $0x50] sm:$0xff]
    %v412 = vld [vmem:[%s400 + $0x58] sm:$0xff]
    %v413 = vld [vmem:[%s400 + $0x60] sm:$0xff]
    %v414 = vld [vmem:[%s400 + $0x68] sm:$0xff]
    %v415 = vld [vmem:[%s400 + $0x70] sm:$0xff]
    %v416 = vld [vmem:[%s400 + $0x78] sm:$0xff]
    %v417 = vld [vmem:[%s40 + $0x9] sm:$0x1]
    %v418 = vlaneseq
    %v419 = vshrl.u32 %v418, 7
    %v420 = vsub.s32 0, %v419
    %v421 = vrot.slane %v417, %v420
    %422 = vmatprep.subr.mxu0 0.0
    %423 = vmatpush1.msra.mxu0 %v401
    %424 = vmatprep.subr.mxu0 0.0
    %425 = vmatpush1.msra.mxu0 %v402
    %426 = vmatprep.subr.mxu0 0.0
    %427 = vmatpush1.msra.mxu0 %v403
    %428 = vmatprep.subr.mxu0 0.0
    %429 = vmatpush1.msra.mxu0 %v404
    %430 = vmatprep.subr.mxu0 0.0
    %431 = vmatpush1.msra.mxu0 %v405
    %432 = vmatprep.subr.mxu0 0.0
    %433 = vmatpush1.msra.mxu0 %v406
    %434 = vmatprep.subr.mxu0 0.0
    %435 = vmatpush1.msra.mxu0 %v407
    %436 = vmatprep.subr.mxu0 0.0
    %437 = vmatpush1.msra.mxu0 %v408
    %438 = vmatprep.subr.mxu0 0.0
    %439 = vmatpush1.msra.mxu0 %v409
    %440 = vmatprep.subr.mxu0 0.0
    %441 = vmatpush1.msra.mxu0 %v410
    %442 = vmatprep.subr.mxu0 0.0
    %443 = vmatpush1.msra.mxu0 %v411
    %444 = vmatprep.subr.mxu0 0.0
    %445 = vmatpush1.msra.mxu0 %v412
    %446 = vmatprep.subr.mxu0 0.0
    %447 = vmatpush1.msra.mxu0 %v413
    %448 = vmatprep.subr.mxu0 0.0
    %449 = vmatpush1.msra.mxu0 %v414
    %450 = vmatprep.subr.mxu0 0.0
    %451 = vmatpush1.msra.mxu0 %v415
    %452 = vmatprep.subr.mxu0 0.0
    %453 = vmatpush1.msra.mxu0 %v416
    %454 = vmatprep.subr.mxu0 0.0
    %455 = vmatpush1.msra.mxu0 0.0
    %456 = vmatprep.subr.mxu0 0.0
    %457 = vmatpush1.msra.mxu0 0.0
    %458 = vmatprep.subr.mxu0 0.0
    %459 = vmatpush1.msra.mxu0 0.0
    %460 = vmatprep.subr.mxu0 0.0
    %461 = vmatpush1.msra.mxu0 0.0
    %462 = vmatprep.subr.mxu0 0.0
    %463 = vmatpush1.msra.mxu0 0.0
    %464 = vmatprep.subr.mxu0 0.0
    %465 = vmatpush1.msra.mxu0 0.0
    %466 = vmatprep.subr.mxu0 0.0
    %467 = vmatpush1.msra.mxu0 0.0
    %468 = vmatprep.subr.mxu0 0.0
    %469 = vmatpush1.msra.mxu0 0.0
    %470 = vmatprep.subr.mxu0 0.0
    %471 = vmatpush1.msra.mxu0 0.0
    %472 = vmatprep.subr.mxu0 0.0
    %473 = vmatpush1.msra.mxu0 0.0
    %474 = vmatprep.subr.mxu0 0.0
    %475 = vmatpush1.msra.mxu0 0.0
    %476 = vmatprep.subr.mxu0 0.0
    %477 = vmatpush1.msra.mxu0 0.0
    %478 = vmatprep.subr.mxu0 0.0
    %479 = vmatpush1.msra.mxu0 0.0
    %480 = vmatprep.subr.mxu0 0.0
    %481 = vmatpush1.msra.mxu0 0.0
    %482 = vmatprep.subr.mxu0 0.0
    %483 = vmatpush1.msra.mxu0 0.0
    %484 = vmatprep.subr.mxu0 0.0
    %485 = vmatpush1.msra.mxu0 0.0
    %486 = vmatprep.mubr.f32.mxu0 0.0
    %487 = vmatmul.mubr.f32.gmra.mrb[0].mxu0 %v399
    %v488 = vpop.f32.mrb[0].mxu0
    %v489 = vadd.f32 %v421, %v488
    %v490 = vpop.f32.mrb[0].mxu0
    %491 = vdwg.mxu0
    %v492 = vxor.u32 %v489, 2147483648
    %v493 = vmul.f32 %v492, 1.442695
    %v494 = vpow.pop %v493
    %v495 = vadd.f32 %v494, 1.0
    %v496 = vrcp.pop %v495
    %v497 = vmul.f32 1.0, %v496
    %498 = vst [vmem:[%s2] sm:$0xff] %v497
    // Predicated region
    $region18: #{forward.1} parent=1 // pred_check
      _
    $region19: #{forward.1} parent=1 // pred_check_branch
      %500 = sbr.rel (0) target = $region21
    $region20: #{forward.1} parent=1 // pred_region
      _
    $region21: #{forward.1} parent=1 // pred_fallthru
      _
    // Predicated region
    $region22: #{forward.1} parent=1 // pred_check
      _
    $region23: #{forward.1} parent=1 // pred_check_branch
      %502 = sbr.rel (0) target = $region25
    $region24: #{forward.1} parent=1 // pred_region
      _
    $region25: #{forward.1} parent=1 // pred_fallthru
      _
    %503 = vsyncpa [#allocation3], 1
    %504 = vsyncpa [#allocation5], 1

</llo_original>
